<compile_context>
chip_gen: v7x
topology: tpu7x:2x2x1
jax: 0.10.0
libtpu: 0.0.40
codegen_flags: <defaults>
</compile_context>

<pallas_src>
import functools

import jax
import jax.numpy as jnp
from jax.experimental import pallas as pl
from jax.experimental.pallas import tpu as pltpu


def _encoder_kernel(x_ref, w_ref, b_ref, z_ref, pooled_ref, *,
                    num_k, batch, window, k_max, c_in, hidden, pooling_mode):
    """grid=() kernel: every ref is the whole array, resident in VMEM.

    x_ref:      (batch, num_k, window + k_max - 1, c_in)  bf16 (trailing rows are zero)
    w_ref:      (num_k*k_max*c_in, num_k*hidden)          bf16, block-diagonal
    b_ref:      (1, num_k*hidden)                          f32
    z_ref:      (batch, window, num_k*hidden)              f32
    pooled_ref: (batch, num_k*hidden)                      f32
    """
    x = x_ref[...]
    # im2col built once for all (k, b):
    #   lhs[b*window + h, k*k_max*c_in + kh*c_in + d] = x_pad[b, k, h + kh, d]
    cols = [x[:, k, kh:kh + window, :] for k in range(num_k) for kh in range(k_max)]
    lhs = jnp.concatenate(cols, axis=-1).reshape(batch * window, num_k * k_max * c_in)

    # Single block-diagonal GEMM (bf16 operands, f32 accumulation) + one f32 bias add.
    # Weight rows for kh >= K_i and all off-diagonal blocks are exactly zero, so every
    # conv sees only its own k_max-deep contraction slice.
    z = jnp.dot(lhs, w_ref[...], preferred_element_type=jnp.float32) + b_ref[...]
    z = z.reshape(batch, window, num_k * hidden)

    z_ref[...] = z                                   # lane-dense single store
    if pooling_mode == "max":
        pooled_ref[...] = jnp.max(z, axis=1)         # full-length max pool per batch row
    else:                                            # 'mean'
        pooled_ref[...] = jnp.mean(z, axis=1)


def prepare_encoder_params(weights, biases, *, mxu_dtype=jnp.bfloat16):
    """One-time parameter preparation. Hoisted OUT of the forward path: call once, cache.

    weights[i]: (hidden, 1, K_i, c_in)   -- PyTorch Conv2d(1, hidden, (K_i, c_in)) weight
    biases[i]:  (hidden,)
    Returns (w_bd, b_cat, meta):
      w_bd:  (num_k*k_max*c_in, num_k*hidden) block-diagonal flattened weights (mxu_dtype);
             rows for kh >= K_i and off-diagonal blocks are exactly zero (required invariant).
      b_cat: (1, num_k*hidden) f32 concatenated biases (same column order as pooled_z).
    """
    num_k = len(weights)
    hidden = int(weights[0].shape[0])
    c_in = int(weights[0].shape[3])
    k_max = max(int(w.shape[2]) for w in weights)
    depth = num_k * k_max * c_in

    w_bd = jnp.zeros((depth, num_k * hidden), jnp.float32)
    for k, w in enumerate(weights):
        K = int(w.shape[2])
        # (hidden, 1, K, c_in) -> (K, c_in, hidden) -> (K*c_in, hidden)
        wk = jnp.transpose(w[:, 0].astype(jnp.float32), (1, 2, 0)).reshape(K * c_in, hidden)
        w_bd = w_bd.at[k * k_max * c_in: k * k_max * c_in + K * c_in,
                       k * hidden:(k + 1) * hidden].set(wk)
    w_bd = w_bd.astype(mxu_dtype)

    b_cat = jnp.concatenate(
        [b.astype(jnp.float32).reshape(1, hidden) for b in biases], axis=1)
    meta = dict(num_k=num_k, hidden=hidden, c_in=c_in, k_max=k_max)
    return w_bd, b_cat, meta


@functools.partial(
    jax.jit,
    static_argnames=("window_size", "pooling_mode", "num_k", "k_max", "hidden"))
def encoder_forward(x, w_bd, b_cat, *, window_size, pooling_mode,
                    num_k, k_max, hidden):
    """x: (B, num_k, window_size, c_in) f32, PyTorch input layout.

    Returns (z_list, x, pooled) mirroring the torch return tuple (output, x, pooled_z):
      z_list[i]: (B, window_size, hidden)   == torch output[i].transpose(1, 2) (channels-last)
      pooled:    (B, num_k * hidden)        == torch pooled_z
    """
    B, nk_in, H, c_in = x.shape
    assert nk_in == num_k and H == window_size

    # (k_max-1) trailing zero rows so in-kernel shifted slices x_pad[h+kh] are plain loads;
    # cast to the MXU dtype once here (single pass, halves input DMA bytes).
    x_pad = jnp.pad(x, ((0, 0), (0, 0), (0, k_max - 1), (0, 0))).astype(w_bd.dtype)

    nh = num_k * hidden
    cost = pl.CostEstimate(
        flops=2 * B * window_size * (num_k * k_max * c_in) * nh,
        transcendentals=0,
        bytes_accessed=int(x_pad.size * x_pad.dtype.itemsize
                           + w_bd.size * w_bd.dtype.itemsize
                           + b_cat.size * 4
                           + B * window_size * nh * 4
                           + B * nh * 4),
    )

    kernel = functools.partial(
        _encoder_kernel, num_k=num_k, batch=B, window=window_size,
        k_max=k_max, c_in=c_in, hidden=hidden, pooling_mode=pooling_mode)

    z_slab, pooled = pl.pallas_call(
        kernel,
        out_shape=(
            jax.ShapeDtypeStruct((B, window_size, nh), jnp.float32),
            jax.ShapeDtypeStruct((B, nh), jnp.float32),
        ),
        # grid=() : whole (~30 KB) problem resident in VMEM, single kernel invocation.
        in_specs=[pl.BlockSpec(memory_space=pltpu.MemorySpace.VMEM)] * 3,
        out_specs=(pl.BlockSpec(memory_space=pltpu.MemorySpace.VMEM),
                   pl.BlockSpec(memory_space=pltpu.MemorySpace.VMEM)),
        cost_estimate=cost,
    )(x_pad, w_bd, b_cat)

    z_list = [z_slab[:, :, k * hidden:(k + 1) * hidden] for k in range(num_k)]
    return z_list, x, pooled


def _reference(x, weights, biases, pooling_mode):
    """Pure-JAX f32 reference implementing the Conv2d + pooling from first principles."""
    B, num_k, H, D = x.shape
    z_list, pooled = [], []
    for i, (w, b) in enumerate(zip(weights, biases)):
        K, hidden = w.shape[2], w.shape[0]
        xp = jnp.pad(x[:, i], ((0, 0), (0, K - 1), (0, 0)))      # F.pad(..., (0,0,0,K-1))
        out = jnp.zeros((B, H, hidden), jnp.float32)
        for kh in range(K):
            out = out + jnp.einsum("bhd,cd->bhc", xp[:, kh:kh + H, :], w[:, 0, kh, :])
        out = out + b[None, None, :]
        z_list.append(out)                                       # channels-last
        pooled.append(out.max(axis=1) if pooling_mode == "max" else out.mean(axis=1))
    return z_list, jnp.concatenate(pooled, axis=1)


if __name__ == "__main__":
    # Small shapes consistent with the module: batch=2, window=16, input_dim=32, hidden=16.
    B = 2
    input_dim = 32
    hidden_dim = 16
    window_size = 16
    kernel_sizes = [2, 3, 4]
    num_k = len(kernel_sizes)

    key = jax.random.PRNGKey(0)
    kx, *kws = jax.random.split(key, 1 + 2 * num_k)
    x = jax.random.normal(kx, (B, num_k, window_size, input_dim), jnp.float32)

    weights, biases = [], []
    for i, K in enumerate(kernel_sizes):
        weights.append(0.05 * jax.random.normal(
            kws[2 * i], (hidden_dim, 1, K, input_dim), jnp.float32))
        biases.append(0.1 * jax.random.normal(
            kws[2 * i + 1], (hidden_dim,), jnp.float32))

    # One-time parameter preparation (cache this in real use; NOT on the forward path).
    w_bd, b_cat, meta = prepare_encoder_params(weights, biases)

    for mode in ("max", "mean"):
        z_list, x_out, pooled = encoder_forward(
            x, w_bd, b_cat, window_size=window_size, pooling_mode=mode,
            num_k=meta["num_k"], k_max=meta["k_max"], hidden=meta["hidden"])
        pooled = jax.block_until_ready(pooled)
        z_list = [jax.block_until_ready(z) for z in z_list]

        z_ref, pooled_ref = _reference(x, weights, biases, mode)
        assert x_out.shape == x.shape
        assert pooled.shape == (B, num_k * hidden_dim), pooled.shape
        for k in range(num_k):
            assert z_list[k].shape == (B, window_size, hidden_dim), z_list[k].shape
            # bf16 MXU operands (f32 accumulation) -> tolerance loosened vs pure-f32 reference.
            assert jnp.allclose(z_list[k], z_ref[k], rtol=5e-2, atol=5e-2), (
                k, float(jnp.max(jnp.abs(z_list[k] - z_ref[k]))))
        assert jnp.allclose(pooled, pooled_ref, rtol=5e-2, atol=5e-2), float(
            jnp.max(jnp.abs(pooled - pooled_ref)))

    print("KERNEL_OK")
</pallas_src>

<mosaic_0001>
module attributes {stable_mosaic.version = 11 : i64} {
  func.func @_encoder_kernel(%arg0: memref<2x3x19x32xbf16, #tpu.memory_space<vmem>>, %arg1: memref<384x48xbf16, #tpu.memory_space<vmem>>, %arg2: memref<1x48xf32, #tpu.memory_space<vmem>>, %arg3: memref<2x16x48xf32, #tpu.memory_space<vmem>>, %arg4: memref<2x48xf32, #tpu.memory_space<vmem>>) attributes {dimension_semantics = [], scalar_prefetch = 0 : i64, scratch_operands = 0 : i64, tpu.core_type = #tpu.core_type<tc>} {
    %c0 = arith.constant 0 : index
    %c0_0 = arith.constant 0 : index
    %c0_1 = arith.constant 0 : index
    %c0_2 = arith.constant 0 : index
    %0 = vector.load %arg0[%c0, %c0_0, %c0_1, %c0_2] : memref<2x3x19x32xbf16, #tpu.memory_space<vmem>>, vector<2x3x19x32xbf16>
    %1 = vector.extract_strided_slice %0 {offsets = [0, 0, 0, 0], sizes = [2, 1, 16, 32], strides = [1, 1, 1, 1]} : vector<2x3x19x32xbf16> to vector<2x1x16x32xbf16>
    %2 = vector.shape_cast %1 : vector<2x1x16x32xbf16> to vector<2x16x32xbf16>
    %3 = vector.extract_strided_slice %0 {offsets = [0, 0, 1, 0], sizes = [2, 1, 16, 32], strides = [1, 1, 1, 1]} : vector<2x3x19x32xbf16> to vector<2x1x16x32xbf16>
    %4 = vector.shape_cast %3 : vector<2x1x16x32xbf16> to vector<2x16x32xbf16>
    %5 = vector.extract_strided_slice %0 {offsets = [0, 0, 2, 0], sizes = [2, 1, 16, 32], strides = [1, 1, 1, 1]} : vector<2x3x19x32xbf16> to vector<2x1x16x32xbf16>
    %6 = vector.shape_cast %5 : vector<2x1x16x32xbf16> to vector<2x16x32xbf16>
    %7 = vector.extract_strided_slice %0 {offsets = [0, 0, 3, 0], sizes = [2, 1, 16, 32], strides = [1, 1, 1, 1]} : vector<2x3x19x32xbf16> to vector<2x1x16x32xbf16>
    %8 = vector.shape_cast %7 : vector<2x1x16x32xbf16> to vector<2x16x32xbf16>
    %9 = vector.extract_strided_slice %0 {offsets = [0, 1, 0, 0], sizes = [2, 1, 16, 32], strides = [1, 1, 1, 1]} : vector<2x3x19x32xbf16> to vector<2x1x16x32xbf16>
    %10 = vector.shape_cast %9 : vector<2x1x16x32xbf16> to vector<2x16x32xbf16>
    %11 = vector.extract_strided_slice %0 {offsets = [0, 1, 1, 0], sizes = [2, 1, 16, 32], strides = [1, 1, 1, 1]} : vector<2x3x19x32xbf16> to vector<2x1x16x32xbf16>
    %12 = vector.shape_cast %11 : vector<2x1x16x32xbf16> to vector<2x16x32xbf16>
    %13 = vector.extract_strided_slice %0 {offsets = [0, 1, 2, 0], sizes = [2, 1, 16, 32], strides = [1, 1, 1, 1]} : vector<2x3x19x32xbf16> to vector<2x1x16x32xbf16>
    %14 = vector.shape_cast %13 : vector<2x1x16x32xbf16> to vector<2x16x32xbf16>
    %15 = vector.extract_strided_slice %0 {offsets = [0, 1, 3, 0], sizes = [2, 1, 16, 32], strides = [1, 1, 1, 1]} : vector<2x3x19x32xbf16> to vector<2x1x16x32xbf16>
    %16 = vector.shape_cast %15 : vector<2x1x16x32xbf16> to vector<2x16x32xbf16>
    %17 = vector.extract_strided_slice %0 {offsets = [0, 2, 0, 0], sizes = [2, 1, 16, 32], strides = [1, 1, 1, 1]} : vector<2x3x19x32xbf16> to vector<2x1x16x32xbf16>
    %18 = vector.shape_cast %17 : vector<2x1x16x32xbf16> to vector<2x16x32xbf16>
    %19 = vector.extract_strided_slice %0 {offsets = [0, 2, 1, 0], sizes = [2, 1, 16, 32], strides = [1, 1, 1, 1]} : vector<2x3x19x32xbf16> to vector<2x1x16x32xbf16>
    %20 = vector.shape_cast %19 : vector<2x1x16x32xbf16> to vector<2x16x32xbf16>
    %21 = vector.extract_strided_slice %0 {offsets = [0, 2, 2, 0], sizes = [2, 1, 16, 32], strides = [1, 1, 1, 1]} : vector<2x3x19x32xbf16> to vector<2x1x16x32xbf16>
    %22 = vector.shape_cast %21 : vector<2x1x16x32xbf16> to vector<2x16x32xbf16>
    %23 = vector.extract_strided_slice %0 {offsets = [0, 2, 3, 0], sizes = [2, 1, 16, 32], strides = [1, 1, 1, 1]} : vector<2x3x19x32xbf16> to vector<2x1x16x32xbf16>
    %24 = vector.shape_cast %23 : vector<2x1x16x32xbf16> to vector<2x16x32xbf16>
    %25 = tpu.concatenate %2, %4, %6, %8, %10, %12, %14, %16, %18, %20, %22, %24 in 2 : vector<2x16x32xbf16>, vector<2x16x32xbf16>, vector<2x16x32xbf16>, vector<2x16x32xbf16>, vector<2x16x32xbf16>, vector<2x16x32xbf16>, vector<2x16x32xbf16>, vector<2x16x32xbf16>, vector<2x16x32xbf16>, vector<2x16x32xbf16>, vector<2x16x32xbf16>, vector<2x16x32xbf16> -> vector<2x16x384xbf16>
    %26 = vector.shape_cast %25 : vector<2x16x384xbf16> to vector<32x384xbf16>
    %c0_3 = arith.constant 0 : index
    %c0_4 = arith.constant 0 : index
    %27 = vector.load %arg1[%c0_3, %c0_4] : memref<384x48xbf16, #tpu.memory_space<vmem>>, vector<384x48xbf16>
    %cst = arith.constant dense<0.000000e+00> : vector<32x48xf32>
    %28 = tpu.matmul %26, %27, %cst {dimension_numbers = #tpu.dot_dimension_numbers<[1], [0], [0], [1], [0, 0, 1, 1], [], []>} : vector<32x384xbf16>, vector<384x48xbf16>, vector<32x48xf32> -> vector<32x48xf32>
    %c0_5 = arith.constant 0 : index
    %c0_6 = arith.constant 0 : index
    %29 = vector.load %arg2[%c0_5, %c0_6] : memref<1x48xf32, #tpu.memory_space<vmem>>, vector<1x48xf32>
    %30 = vector.broadcast %29 : vector<1x48xf32> to vector<32x48xf32>
    %31 = arith.addf %28, %30 : vector<32x48xf32>
    %32 = vector.shape_cast %31 : vector<32x48xf32> to vector<2x16x48xf32>
    %c0_7 = arith.constant 0 : index
    %c0_8 = arith.constant 0 : index
    %c0_9 = arith.constant 0 : index
    %33 = vector.load %arg3[%c0_7, %c0_8, %c0_9] : memref<2x16x48xf32, #tpu.memory_space<vmem>>, vector<2x16x48xf32>
    tpu.vector_store %arg3[%c0_7, %c0_8, %c0_9], %32 {strides = array<i32>} : memref<2x16x48xf32, #tpu.memory_space<vmem>>, vector<2x16x48xf32>,
    %cst_10 = arith.constant dense<0xFF800000> : vector<2x48xf32>
    %34 = vector.multi_reduction <maximumf>, %32, %cst_10 [1] : vector<2x16x48xf32> to vector<2x48xf32>
    %c0_11 = arith.constant 0 : index
    %c0_12 = arith.constant 0 : index
    %35 = vector.load %arg4[%c0_11, %c0_12] : memref<2x48xf32, #tpu.memory_space<vmem>>, vector<2x48xf32>
    tpu.vector_store %arg4[%c0_11, %c0_12], %34 {strides = array<i32>} : memref<2x48xf32, #tpu.memory_space<vmem>>, vector<2x48xf32>,
    return
  }
}

</mosaic_0001>

<llo_original>
// kernel: encoder_forward.1
$region0: #{encoder_forward.1}
  #allocation0 [shape = 'u32[]', space=smem, size = 0x4, offset = 0x4, fixed_abs, tag = 'smem constant byte address 0x4 - core index']
  #allocation1 [shape = 'u32[144,128]{1,0:T(1,128)}', space=vmem, size = 0x12000, scoped, tag = 'internal scratch']
  %s0 = inlined_call_operand.vmem [shape: bf16[2,3,19,32], index: 0, kind: input, shape index: {}]
  %s1 = inlined_call_operand.vmem [shape: bf16[384,48], index: 1, kind: input, shape index: {}]
  %s2 = inlined_call_operand.vmem [shape: f32[1,48], index: 2, kind: input, shape index: {}]
  %s3 = inlined_call_operand.vmem [shape: f32[2,16,48], index: 3, kind: output, shape index: {0}]
  %s4 = inlined_call_operand.hbm [shape: f32[2,48], index: 4, kind: output, shape index: {1}]
  %5 = xla_tuple %s3, %s4
  %s6 = sld [smem:[#allocation0]]
  $region30: #{encoder_forward.1} parent=0
    _
  %s8 = ssub.s32 1, %s6
  %s9 = scalar_select 0, %s8, %s6
  $region1: #{encoder_forward.1} parent=0
    #allocation2 [shape = 'u8[1024]{0}', space=vmem, size = 0x400, scoped, tag = 'output window, operand 1, single buffered']
    #allocation3 [shape = 's32[1]{0}', space=sflag, size = 0x4, scoped, tag = 'scoped memory for encoder_forward.1']
    %10 = vsyncpa [#allocation3], 0
    // Predicated region
    $region2: #{encoder_forward.1} parent=1 // pred_check
      _
    $region3: #{encoder_forward.1} parent=1 // pred_check_branch
      %12 = sbr.rel (0) target = $region5
    $region4: #{encoder_forward.1} parent=1 // pred_region
      _
    $region5: #{encoder_forward.1} parent=1 // pred_fallthru
      _
    // Predicated region
    $region6: #{encoder_forward.1} parent=1 // pred_check
      _
    $region7: #{encoder_forward.1} parent=1 // pred_check_branch
      %14 = sbr.rel (0) target = $region9
    $region8: #{encoder_forward.1} parent=1 // pred_region
      _
    $region9: #{encoder_forward.1} parent=1 // pred_fallthru
      _
    // Predicated region
    $region10: #{encoder_forward.1} parent=1 // pred_check
      _
    $region11: #{encoder_forward.1} parent=1 // pred_check_branch
      %16 = sbr.rel (0) target = $region13
    $region12: #{encoder_forward.1} parent=1 // pred_region
      _
    $region13: #{encoder_forward.1} parent=1 // pred_fallthru
      _
    %v18 = vld [vmem:[%s0] sm:$0xf]
    %v19 = vld [vmem:[%s0 + $0x4] sm:$0xf]
    %v20 = vld [vmem:[%s0 + $0x8] sm:$0x3]
    %v21 = vld [vmem:[%s0 + $0xc] sm:$0xf]
    %v22 = vld [vmem:[%s0 + $0x10] sm:$0xf]
    %v23 = vld [vmem:[%s0 + $0x14] sm:$0x3]
    %v24 = vld [vmem:[%s0 + $0x18] sm:$0xf]
    %v25 = vld [vmem:[%s0 + $0x1c] sm:$0xf]
    %v26 = vld [vmem:[%s0 + $0x20] sm:$0x3]
    %v27 = vld [vmem:[%s0 + $0x24] sm:$0xf]
    %v28 = vld [vmem:[%s0 + $0x28] sm:$0xf]
    %v29 = vld [vmem:[%s0 + $0x2c] sm:$0x3]
    %v30 = vld [vmem:[%s0 + $0x30] sm:$0xf]
    %v31 = vld [vmem:[%s0 + $0x34] sm:$0xf]
    %v32 = vld [vmem:[%s0 + $0x38] sm:$0x3]
    %v33 = vld [vmem:[%s0 + $0x3c] sm:$0xf]
    %v34 = vld [vmem:[%s0 + $0x40] sm:$0xf]
    %v35 = vld [vmem:[%s0 + $0x44] sm:$0x3]
    %v40 = vunpack.c.l.b16 %v18
    %v41 = vunpack.c.l.b16 %v19
    %v42 = vunpack.c.l.b16 %v27
    %v43 = vunpack.c.l.b16 %v28
    %v44 = vpack.c.b16 %v41, %v40
    %v45 = vpack.c.b16 %v43, %v42
    %v48 = vunpack.c.l.b16 %v20
    %v49 = vunpack.c.l.b16 %v29
    %v50 = vpack.c.b16 %v48, %v48
    %v51 = vpack.c.b16 %v49, %v49
    %vm52 = vsmask.f32 7424
    %v54 = vshrl.u32 %v44, 16
    %v56 = vshll.u32 %v44, 16
    %v58 = vrot.slane %v56, 1
    %v59 = vor.u32 %v54, %v58
    %v61 = vshll.u32 %v50, 16
    %v63 = vrot.slane %v61, 1
    %v64 = vsel %vm52, %v59, %v63
    %v66 = vshrl.u32 %v45, 16
    %v68 = vshll.u32 %v45, 16
    %v70 = vrot.slane %v68, 1
    %v71 = vor.u32 %v66, %v70
    %v73 = vshll.u32 %v51, 16
    %v75 = vrot.slane %v73, 1
    %v76 = vsel %vm52, %v71, %v75
    %77 = vrot.lane.b32.xlu0 %v64, 32
    %v78 = vpop.permute.xlu0 %77
    %79 = vrot.lane.b32.xlu0 %v76, 32
    %v80 = vpop.permute.xlu0 %79
    %vm81 = vcmask 1046528
    %v82 = vrot.slane %v44, 1
    %v83 = vrot.slane %v50, 1
    %v84 = vsel %vm81, %v82, %v83
    %v85 = vrot.slane %v45, 1
    %v86 = vrot.slane %v51, 1
    %v87 = vsel %vm81, %v85, %v86
    %88 = vrot.lane.b32.xlu0 %v84, 64
    %v89 = vpop.permute.xlu0 %88
    %90 = vrot.lane.b32.xlu0 %v87, 64
    %v91 = vpop.permute.xlu0 %90
    %vm92 = vsmask.f32 6400
    %v93 = vrot.slane %v54, 1
    %v94 = vrot.slane %v56, 2
    %v95 = vor.u32 %v93, %v94
    %v96 = vshrl.u32 %v50, 16
    %v98 = vrot.slane %v96, 1
    %v99 = vrot.slane %v61, 2
    %v100 = vor.u32 %v98, %v99
    %v101 = vsel %vm92, %v95, %v100
    %v102 = vrot.slane %v66, 1
    %v103 = vrot.slane %v68, 2
    %v104 = vor.u32 %v102, %v103
    %v105 = vshrl.u32 %v51, 16
    %v107 = vrot.slane %v105, 1
    %v108 = vrot.slane %v73, 2
    %v109 = vor.u32 %v107, %v108
    %v110 = vsel %vm92, %v104, %v109
    %111 = vrot.lane.b32.xlu0 %v101, 96
    %v112 = vpop.permute.xlu0 %111
    %113 = vrot.lane.b32.xlu0 %v110, 96
    %v114 = vpop.permute.xlu0 %113
    %v119 = vunpack.c.l.b16 %v21
    %v120 = vunpack.c.l.b16 %v22
    %v121 = vunpack.c.l.b16 %v30
    %v122 = vunpack.c.l.b16 %v31
    %v123 = vpack.c.b16 %v120, %v119
    %v124 = vpack.c.b16 %v122, %v121
    %v127 = vunpack.c.l.b16 %v23
    %v128 = vunpack.c.l.b16 %v32
    %v129 = vpack.c.b16 %v127, %v127
    %v130 = vpack.c.b16 %v128, %v128
    %v132 = vshrl.u32 %v123, 16
    %v134 = vshll.u32 %v123, 16
    %v136 = vrot.slane %v134, 1
    %v137 = vor.u32 %v132, %v136
    %v139 = vshll.u32 %v129, 16
    %v141 = vrot.slane %v139, 1
    %v142 = vsel %vm52, %v137, %v141
    %v144 = vshrl.u32 %v124, 16
    %v146 = vshll.u32 %v124, 16
    %v148 = vrot.slane %v146, 1
    %v149 = vor.u32 %v144, %v148
    %v151 = vshll.u32 %v130, 16
    %v153 = vrot.slane %v151, 1
    %v154 = vsel %vm52, %v149, %v153
    %155 = vrot.lane.b32.xlu0 %v142, 32
    %v156 = vpop.permute.xlu0 %155
    %157 = vrot.lane.b32.xlu0 %v154, 32
    %v158 = vpop.permute.xlu0 %157
    %v159 = vrot.slane %v123, 1
    %v160 = vrot.slane %v129, 1
    %v161 = vsel %vm81, %v159, %v160
    %v162 = vrot.slane %v124, 1
    %v163 = vrot.slane %v130, 1
    %v164 = vsel %vm81, %v162, %v163
    %165 = vrot.lane.b32.xlu0 %v161, 64
    %v166 = vpop.permute.xlu0 %165
    %167 = vrot.lane.b32.xlu0 %v164, 64
    %v168 = vpop.permute.xlu0 %167
    %v169 = vrot.slane %v132, 1
    %v170 = vrot.slane %v134, 2
    %v171 = vor.u32 %v169, %v170
    %v172 = vshrl.u32 %v129, 16
    %v174 = vrot.slane %v172, 1
    %v175 = vrot.slane %v139, 2
    %v176 = vor.u32 %v174, %v175
    %v177 = vsel %vm92, %v171, %v176
    %v178 = vrot.slane %v144, 1
    %v179 = vrot.slane %v146, 2
    %v180 = vor.u32 %v178, %v179
    %v181 = vshrl.u32 %v130, 16
    %v183 = vrot.slane %v181, 1
    %v184 = vrot.slane %v151, 2
    %v185 = vor.u32 %v183, %v184
    %v186 = vsel %vm92, %v180, %v185
    %187 = vrot.lane.b32.xlu0 %v177, 96
    %v188 = vpop.permute.xlu0 %187
    %189 = vrot.lane.b32.xlu0 %v186, 96
    %v190 = vpop.permute.xlu0 %189
    %v195 = vunpack.c.l.b16 %v24
    %v196 = vunpack.c.l.b16 %v25
    %v197 = vunpack.c.l.b16 %v33
    %v198 = vunpack.c.l.b16 %v34
    %v199 = vpack.c.b16 %v196, %v195
    %v200 = vpack.c.b16 %v198, %v197
    %v203 = vunpack.c.l.b16 %v26
    %v204 = vunpack.c.l.b16 %v35
    %v205 = vpack.c.b16 %v203, %v203
    %v206 = vpack.c.b16 %v204, %v204
    %v208 = vshrl.u32 %v199, 16
    %v210 = vshll.u32 %v199, 16
    %v212 = vrot.slane %v210, 1
    %v213 = vor.u32 %v208, %v212
    %v215 = vshll.u32 %v205, 16
    %v217 = vrot.slane %v215, 1
    %v218 = vsel %vm52, %v213, %v217
    %v220 = vshrl.u32 %v200, 16
    %v222 = vshll.u32 %v200, 16
    %v224 = vrot.slane %v222, 1
    %v225 = vor.u32 %v220, %v224
    %v227 = vshll.u32 %v206, 16
    %v229 = vrot.slane %v227, 1
    %v230 = vsel %vm52, %v225, %v229
    %231 = vrot.lane.b32.xlu0 %v218, 32
    %v232 = vpop.permute.xlu0 %231
    %233 = vrot.lane.b32.xlu0 %v230, 32
    %v234 = vpop.permute.xlu0 %233
    %v235 = vrot.slane %v199, 1
    %v236 = vrot.slane %v205, 1
    %v237 = vsel %vm81, %v235, %v236
    %v238 = vrot.slane %v200, 1
    %v239 = vrot.slane %v206, 1
    %v240 = vsel %vm81, %v238, %v239
    %241 = vrot.lane.b32.xlu0 %v237, 64
    %v242 = vpop.permute.xlu0 %241
    %243 = vrot.lane.b32.xlu0 %v240, 64
    %v244 = vpop.permute.xlu0 %243
    %v245 = vrot.slane %v208, 1
    %v246 = vrot.slane %v210, 2
    %v247 = vor.u32 %v245, %v246
    %v248 = vshrl.u32 %v205, 16
    %v250 = vrot.slane %v248, 1
    %v251 = vrot.slane %v215, 2
    %v252 = vor.u32 %v250, %v251
    %v253 = vsel %vm92, %v247, %v252
    %v254 = vrot.slane %v220, 1
    %v255 = vrot.slane %v222, 2
    %v256 = vor.u32 %v254, %v255
    %v257 = vshrl.u32 %v206, 16
    %v259 = vrot.slane %v257, 1
    %v260 = vrot.slane %v227, 2
    %v261 = vor.u32 %v259, %v260
    %v262 = vsel %vm92, %v256, %v261
    %263 = vrot.lane.b32.xlu0 %v253, 96
    %v264 = vpop.permute.xlu0 %263
    %265 = vrot.lane.b32.xlu0 %v262, 96
    %v266 = vpop.permute.xlu0 %265
    %vm267 = vcmask 261120
    %v269 = vsel %vm267, %v44, %v78
    %v271 = vsel %vm267, %v45, %v80
    %vm272 = vcmask 523264
    %v274 = vsel %vm272, %v269, %v89
    %v276 = vsel %vm272, %v271, %v91
    %vm277 = vcmask 785408
    %v279 = vsel %vm277, %v274, %v112
    %v282 = vsel %vm277, %v276, %v114
    %v285 = vsel %vm267, %v123, %v156
    %v287 = vsel %vm267, %v124, %v158
    %v289 = vsel %vm272, %v285, %v166
    %v291 = vsel %vm272, %v287, %v168
    %v293 = vsel %vm277, %v289, %v188
    %v296 = vsel %vm277, %v291, %v190
    %v299 = vsel %vm267, %v199, %v232
    %v301 = vsel %vm267, %v200, %v234
    %v303 = vsel %vm272, %v299, %v242
    %v305 = vsel %vm272, %v301, %v244
    %v307 = vsel %vm277, %v303, %v264
    %v310 = vsel %vm277, %v305, %v266
    %v312 = vld [vmem:[%s1] sm:$0xf]
    %v313 = vld [vmem:[%s1 + $0x4] sm:$0xf]
    %v314 = vld [vmem:[%s1 + $0x8] sm:$0xf]
    %v315 = vld [vmem:[%s1 + $0xc] sm:$0xf]
    %v316 = vld [vmem:[%s1 + $0x10] sm:$0xf]
    %v317 = vld [vmem:[%s1 + $0x14] sm:$0xf]
    %v318 = vld [vmem:[%s1 + $0x18] sm:$0xf]
    %v319 = vld [vmem:[%s1 + $0x1c] sm:$0xf]
    %v320 = vld [vmem:[%s1 + $0x20] sm:$0xf]
    %v321 = vld [vmem:[%s1 + $0x24] sm:$0xf]
    %v322 = vld [vmem:[%s1 + $0x28] sm:$0xf]
    %v323 = vld [vmem:[%s1 + $0x2c] sm:$0xf]
    %v324 = vld [vmem:[%s1 + $0x30] sm:$0xf]
    %v325 = vld [vmem:[%s1 + $0x34] sm:$0xf]
    %v326 = vld [vmem:[%s1 + $0x38] sm:$0xf]
    %v327 = vld [vmem:[%s1 + $0x3c] sm:$0xf]
    %v328 = vld [vmem:[%s1 + $0x40] sm:$0xf]
    %v329 = vld [vmem:[%s1 + $0x44] sm:$0xf]
    %v330 = vld [vmem:[%s1 + $0x48] sm:$0xf]
    %v331 = vld [vmem:[%s1 + $0x4c] sm:$0xf]
    %v332 = vld [vmem:[%s1 + $0x50] sm:$0xf]
    %v333 = vld [vmem:[%s1 + $0x54] sm:$0xf]
    %v334 = vld [vmem:[%s1 + $0x58] sm:$0xf]
    %v335 = vld [vmem:[%s1 + $0x5c] sm:$0xf]
    %v336 = vld [vmem:[%s1 + $0x60] sm:$0xf]
    %v337 = vld [vmem:[%s1 + $0x64] sm:$0xf]
    %v338 = vld [vmem:[%s1 + $0x68] sm:$0xf]
    %v339 = vld [vmem:[%s1 + $0x6c] sm:$0xf]
    %v340 = vld [vmem:[%s1 + $0x70] sm:$0xf]
    %v341 = vld [vmem:[%s1 + $0x74] sm:$0xf]
    %v342 = vld [vmem:[%s1 + $0x78] sm:$0xf]
    %v343 = vld [vmem:[%s1 + $0x7c] sm:$0xf]
    %v344 = vld [vmem:[%s1 + $0x80] sm:$0xf]
    %v345 = vld [vmem:[%s1 + $0x84] sm:$0xf]
    %v346 = vld [vmem:[%s1 + $0x88] sm:$0xf]
    %v347 = vld [vmem:[%s1 + $0x8c] sm:$0xf]
    %v348 = vld [vmem:[%s1 + $0x90] sm:$0xf]
    %v349 = vld [vmem:[%s1 + $0x94] sm:$0xf]
    %v350 = vld [vmem:[%s1 + $0x98] sm:$0xf]
    %v351 = vld [vmem:[%s1 + $0x9c] sm:$0xf]
    %v352 = vld [vmem:[%s1 + $0xa0] sm:$0xf]
    %v353 = vld [vmem:[%s1 + $0xa4] sm:$0xf]
    %v354 = vld [vmem:[%s1 + $0xa8] sm:$0xf]
    %v355 = vld [vmem:[%s1 + $0xac] sm:$0xf]
    %v356 = vld [vmem:[%s1 + $0xb0] sm:$0xf]
    %v357 = vld [vmem:[%s1 + $0xb4] sm:$0xf]
    %v358 = vld [vmem:[%s1 + $0xb8] sm:$0xf]
    %v359 = vld [vmem:[%s1 + $0xbc] sm:$0xf]
    %v360 = vld [vmem:[%s2] sm:$0x1]
    %v362 = vlaneseq
    %v363 = vshrl.u32 %v362, 7
    %v364 = vsub.s32 0, %v363
    %v365 = vrot.slane %v360, %v364
    %v415 = vunpack.c.l.b16 %v312
    %v416 = vunpack.c.l.b16 %v313
    %v417 = vunpack.c.l.b16 %v314
    %v418 = vunpack.c.l.b16 %v315
    %v419 = vunpack.c.l.b16 %v316
    %v420 = vunpack.c.l.b16 %v317
    %v421 = vunpack.c.l.b16 %v318
    %v422 = vunpack.c.l.b16 %v319
    %v423 = vunpack.c.l.b16 %v320
    %v424 = vunpack.c.l.b16 %v321
    %v425 = vunpack.c.l.b16 %v322
    %v426 = vunpack.c.l.b16 %v323
    %v427 = vunpack.c.l.b16 %v324
    %v428 = vunpack.c.l.b16 %v325
    %v429 = vunpack.c.l.b16 %v326
    %v430 = vunpack.c.l.b16 %v327
    %v431 = vunpack.c.l.b16 %v328
    %v432 = vunpack.c.l.b16 %v329
    %v433 = vunpack.c.l.b16 %v330
    %v434 = vunpack.c.l.b16 %v331
    %v435 = vunpack.c.l.b16 %v332
    %v436 = vunpack.c.l.b16 %v333
    %v437 = vunpack.c.l.b16 %v334
    %v438 = vunpack.c.l.b16 %v335
    %v439 = vunpack.c.l.b16 %v336
    %v440 = vunpack.c.l.b16 %v337
    %v441 = vunpack.c.l.b16 %v338
    %v442 = vunpack.c.l.b16 %v339
    %v443 = vunpack.c.l.b16 %v340
    %v444 = vunpack.c.l.b16 %v341
    %v445 = vunpack.c.l.b16 %v342
    %v446 = vunpack.c.l.b16 %v343
    %v447 = vunpack.c.l.b16 %v344
    %v448 = vunpack.c.l.b16 %v345
    %v449 = vunpack.c.l.b16 %v346
    %v450 = vunpack.c.l.b16 %v347
    %v451 = vunpack.c.l.b16 %v348
    %v452 = vunpack.c.l.b16 %v349
    %v453 = vunpack.c.l.b16 %v350
    %v454 = vunpack.c.l.b16 %v351
    %v455 = vunpack.c.l.b16 %v352
    %v456 = vunpack.c.l.b16 %v353
    %v457 = vunpack.c.l.b16 %v354
    %v458 = vunpack.c.l.b16 %v355
    %v459 = vunpack.c.l.b16 %v356
    %v460 = vunpack.c.l.b16 %v357
    %v461 = vunpack.c.l.b16 %v358
    %v462 = vunpack.c.l.b16 %v359
    %v463 = vpack.c.b16 %v416, %v415
    %v464 = vpack.c.b16 %v418, %v417
    %v465 = vpack.c.b16 %v420, %v419
    %v466 = vpack.c.b16 %v422, %v421
    %v467 = vpack.c.b16 %v424, %v423
    %v468 = vpack.c.b16 %v426, %v425
    %v469 = vpack.c.b16 %v428, %v427
    %v470 = vpack.c.b16 %v430, %v429
    %v471 = vpack.c.b16 %v432, %v431
    %v472 = vpack.c.b16 %v434, %v433
    %v473 = vpack.c.b16 %v436, %v435
    %v474 = vpack.c.b16 %v438, %v437
    %v475 = vpack.c.b16 %v440, %v439
    %v476 = vpack.c.b16 %v442, %v441
    %v477 = vpack.c.b16 %v444, %v443
    %v478 = vpack.c.b16 %v446, %v445
    %v479 = vpack.c.b16 %v448, %v447
    %v480 = vpack.c.b16 %v450, %v449
    %v481 = vpack.c.b16 %v452, %v451
    %v482 = vpack.c.b16 %v454, %v453
    %v483 = vpack.c.b16 %v456, %v455
    %v484 = vpack.c.b16 %v458, %v457
    %v485 = vpack.c.b16 %v460, %v459
    %v486 = vpack.c.b16 %v462, %v461
    %511 = vmatprep.subr.bf16.mxu0 0
    %512 = vmatpush1.bf16.msra.mxu0 %v463
    %513 = vmatprep.subr.bf16.mxu0 0
    %514 = vmatpush1.bf16.msra.mxu0 %v464
    %515 = vmatprep.subr.bf16.mxu0 0
    %516 = vmatpush1.bf16.msra.mxu0 %v465
    %517 = vmatprep.subr.bf16.mxu0 0
    %518 = vmatpush1.bf16.msra.mxu0 %v466
    %519 = vmatprep.subr.bf16.mxu0 0
    %520 = vmatpush1.bf16.msra.mxu0 %v467
    %521 = vmatprep.subr.bf16.mxu0 0
    %522 = vmatpush1.bf16.msra.mxu0 %v468
    %523 = vmatprep.subr.bf16.mxu0 0
    %524 = vmatpush1.bf16.msra.mxu0 %v469
    %525 = vmatprep.subr.bf16.mxu0 0
    %526 = vmatpush1.bf16.msra.mxu0 %v470
    %527 = vmatprep.subr.bf16.mxu0 0
    %528 = vmatpush1.bf16.msra.mxu0 %v471
    %529 = vmatprep.subr.bf16.mxu0 0
    %530 = vmatpush1.bf16.msra.mxu0 %v472
    %531 = vmatprep.subr.bf16.mxu0 0
    %532 = vmatpush1.bf16.msra.mxu0 %v473
    %533 = vmatprep.subr.bf16.mxu0 0
    %534 = vmatpush1.bf16.msra.mxu0 %v474
    %535 = vmatprep.subr.bf16.mxu0 0
    %536 = vmatpush1.bf16.msra.mxu0 %v475
    %537 = vmatprep.subr.bf16.mxu0 0
    %538 = vmatpush1.bf16.msra.mxu0 %v476
    %539 = vmatprep.subr.bf16.mxu0 0
    %540 = vmatpush1.bf16.msra.mxu0 %v477
    %541 = vmatprep.subr.bf16.mxu0 0
    %542 = vmatpush1.bf16.msra.mxu0 %v478
    %543 = vmatprep.mubr.bf16.mxu0 %v293
    %544 = vmatmul.mubr.bf16.gmra.mrb[0].mxu0 %v279
    %v545 = vpop.f32.mrb[0].mxu0
    %v546 = vadd.f32 %v365, %v545
    %v547 = vpop.f32.mrb[0].mxu0
    %v548 = vpop.f32.mrb[0].mxu0
    %v549 = vadd.f32 %v365, %v548
    %v550 = vpop.f32.mrb[0].mxu0
    %551 = vmatprep.mubr.bf16.mxu0 %v296
    %552 = vmatmul.mubr.bf16.gmra.mrb[0].mxu0 %v282
    %v553 = vpop.f32.mrb[0].mxu0
    %v554 = vadd.f32 %v365, %v553
    %v555 = vpop.f32.mrb[0].mxu0
    %v556 = vpop.f32.mrb[0].mxu0
    %v557 = vadd.f32 %v365, %v556
    %v558 = vpop.f32.mrb[0].mxu0
    %559 = vdwg.mxu0
    %560 = vmatprep.subr.bf16.mxu0 0
    %561 = vmatpush1.bf16.msra.mxu0 %v479
    %562 = vmatprep.subr.bf16.mxu0 0
    %563 = vmatpush1.bf16.msra.mxu0 %v480
    %564 = vmatprep.subr.bf16.mxu0 0
    %565 = vmatpush1.bf16.msra.mxu0 %v481
    %566 = vmatprep.subr.bf16.mxu0 0
    %567 = vmatpush1.bf16.msra.mxu0 %v482
    %568 = vmatprep.subr.bf16.mxu0 0
    %569 = vmatpush1.bf16.msra.mxu0 %v483
    %570 = vmatprep.subr.bf16.mxu0 0
    %571 = vmatpush1.bf16.msra.mxu0 %v484
    %572 = vmatprep.subr.bf16.mxu0 0
    %573 = vmatpush1.bf16.msra.mxu0 %v485
    %574 = vmatprep.subr.bf16.mxu0 0
    %575 = vmatpush1.bf16.msra.mxu0 %v486
    %576 = vmatprep.subr.bf16.mxu0 0
    %577 = vmatpush1.bf16.msra.mxu0 0
    %578 = vmatprep.subr.bf16.mxu0 0
    %579 = vmatpush1.bf16.msra.mxu0 0
    %580 = vmatprep.subr.bf16.mxu0 0
    %581 = vmatpush1.bf16.msra.mxu0 0
    %582 = vmatprep.subr.bf16.mxu0 0
    %583 = vmatpush1.bf16.msra.mxu0 0
    %584 = vmatprep.subr.bf16.mxu0 0
    %585 = vmatpush1.bf16.msra.mxu0 0
    %586 = vmatprep.subr.bf16.mxu0 0
    %587 = vmatpush1.bf16.msra.mxu0 0
    %588 = vmatprep.subr.bf16.mxu0 0
    %589 = vmatpush1.bf16.msra.mxu0 0
    %590 = vmatprep.subr.bf16.mxu0 0
    %591 = vmatpush1.bf16.msra.mxu0 0
    %592 = vmatprep.mubr.bf16.mxu0 0
    %593 = vmatmul.mubr.bf16.gmra.mrb[0].mxu0 %v307
    %v594 = vpop.f32.mrb[0].mxu0
    %v595 = vadd.f32 %v546, %v594
    %v596 = vpop.f32.mrb[0].mxu0
    %v597 = vpop.f32.mrb[0].mxu0
    %v598 = vadd.f32 %v549, %v597
    %v599 = vpop.f32.mrb[0].mxu0
    %600 = vmatprep.mubr.bf16.mxu0 0
    %601 = vmatmul.mubr.bf16.gmra.mrb[0].mxu0 %v310
    %v602 = vpop.f32.mrb[0].mxu0
    %v603 = vadd.f32 %v554, %v602
    %v604 = vpop.f32.mrb[0].mxu0
    %v605 = vpop.f32.mrb[0].mxu0
    %v606 = vadd.f32 %v557, %v605
    %v607 = vpop.f32.mrb[0].mxu0
    %608 = vdwg.mxu0
    %vm609 = vcmask 392192
    %610 = vst.msk [vmem:[%s3] sm:$0xff] %vm609, %v595
    %611 = vst.msk [vmem:[%s3 + $0x8] sm:$0xff] %vm609, %v598
    %612 = vst.msk [vmem:[%s3 + $0x10] sm:$0xff] %vm609, %v603
    %613 = vst.msk [vmem:[%s3 + $0x18] sm:$0xff] %vm609, %v606
    %v614 = vsel %vm609, %v595, -inf
    %v615 = vsel %vm609, %v598, -inf
    %v616 = vmax.f32 %v614, %v615
    %v617 = vrot.slane %v616, 4
    %v618 = vmax.f32 %v616, %v617
    %v619 = vrot.slane %v618, 2
    %v620 = vmax.f32 %v618, %v619
    %v621 = vrot.slane %v620, 1
    %v622 = vmax.f32 %v620, %v621
    %v623 = vsel %vm609, %v603, -inf
    %v624 = vsel %vm609, %v606, -inf
    %v625 = vmax.f32 %v623, %v624
    %v626 = vrot.slane %v625, 4
    %v627 = vmax.f32 %v625, %v626
    %v628 = vrot.slane %v627, 2
    %v629 = vmax.f32 %v627, %v628
    %v630 = vrot.slane %v629, 1
    %v631 = vmax.f32 %v629, %v630
    %vm634 = vcmask 1041409
    %v635 = vsel %vm634, %v631, %v622
    %vm637 = vcmask 386048
    %638 = vst.msk [vmem:[#allocation2] sm:$0x3] %vm637, %v635
    // Predicated region
    $region14: #{encoder_forward.1} parent=1 // pred_check
      _
    $region15: #{encoder_forward.1} parent=1 // pred_check_branch
      %640 = sbr.rel (0) target = $region17
    $region16: #{encoder_forward.1} parent=1 // pred_region
      _
    $region17: #{encoder_forward.1} parent=1 // pred_fallthru
      _
    // Predicated region
    $region18: #{encoder_forward.1} parent=1 // pred_check
      _
    $region19: #{encoder_forward.1} parent=1 // pred_check_branch
      %642 = sbr.rel (0) target = $region21
    $region20: #{encoder_forward.1} parent=1 // pred_region
      %s644 = ssub.s32 32, 32
      %645 = vsyncadd [#allocation3], %s644
      %s647 = sshll.u32 [#allocation2], 4
      %s648 = int_to_ptr.vmem [resolvable:$true] %s647
      %650 = dma.vmem_to_hbm [thread:$0]  %s648, 32, %s4, [#allocation3]
    $region21: #{encoder_forward.1} parent=1 // pred_fallthru
      _
    // Predicated region
    $region22: #{encoder_forward.1} parent=1 // pred_check
      _
    $region23: #{encoder_forward.1} parent=1 // pred_check_branch
      %652 = sbr.rel (0) target = $region25
    $region24: #{encoder_forward.1} parent=1 // pred_region
      _
    $region25: #{encoder_forward.1} parent=1 // pred_fallthru
      _
    // Predicated region
    $region26: #{encoder_forward.1} parent=1 // pred_check
      _
    $region27: #{encoder_forward.1} parent=1 // pred_check_branch
      %654 = sbr.rel (0) target = $region29
    $region28: #{encoder_forward.1} parent=1 // pred_region
      %655 = dma.done [#allocation3], 32
    $region29: #{encoder_forward.1} parent=1 // pred_fallthru
      _
    %656 = vsyncpa [#allocation3], 1

</llo_original>
